<compile_context>
chip_gen: v5e
topology: v5e:2x2
jax: 0.10.0
libtpu: 0.0.40
codegen_flags: <defaults>
</compile_context>

<pallas_src>
import jax
import jax.numpy as jnp
from jax.experimental import pallas as pl
from jax.experimental.pallas import tpu as pltpu

LANE = 128  # TPU lane width


def _round_up(x, m):
    return (x + m - 1) // m * m


def mlp_kernel(x_ref,
               w1_ref, b1_ref,
               w2_ref, b2_ref,
               wt_ref, bt_ref,
               o_ref):
    # Layer 1: (bm, in) @ (in, 1024), bf16 operands, f32 accumulation.
    h1 = jnp.dot(x_ref[...], w1_ref[...],
                 preferred_element_type=jnp.float32) + b1_ref[...]
    # nn.Dropout(0.2) -> identity (inference)
    # Layer 2: (bm, 1024) @ (1024, 128)
    h2 = jnp.dot(h1.astype(w2_ref.dtype), w2_ref[...],
                 preferred_element_type=jnp.float32) + b2_ref[...]
    # nn.Dropout(0.2), Linear(128,64), nn.Dropout(0.1), Linear(64,16),
    # Linear(16,1) are folded offline into wt/bt (zero-padded to 128 lanes).
    out = jnp.dot(h2.astype(wt_ref.dtype), wt_ref[...],
                  preferred_element_type=jnp.float32) + bt_ref[...]
    o_ref[...] = out.astype(o_ref.dtype)


def _fold_tail(params):
    """Fold layers 3..5 (128->64->16->1) into a single (128, 1) affine map."""
    (w3, b3), (w4, b4), (w5, b5) = params[2], params[3], params[4]
    wt = w3.T @ w4.T @ w5.T                      # (128, 1)
    bt = (b3 @ w4.T + b4) @ w5.T + b5            # (1,)
    return wt, bt


def mlp_forward(x, params, *, block_m=512, compute_dtype=jnp.bfloat16):
    """x: (B, input_size) f32.  params: list of (W (out,in), b (out,)) pairs."""
    B, in_dim = x.shape

    # ---- offline (trace-time) parameter preprocessing ---------------------
    (w1, b1), (w2, b2) = params[0], params[1]
    h2_dim = w2.shape[0]                                     # 128

    w1t = w1.T.astype(compute_dtype)                         # (in, 1024)
    w2t = w2.T.astype(compute_dtype)                         # (1024, 128)
    b1r = b1.reshape(1, -1).astype(jnp.float32)              # (1, 1024)
    b2r = b2.reshape(1, -1).astype(jnp.float32)              # (1, 128)

    wt, bt = _fold_tail(params)                              # (128, 1), (1,)
    # Zero-pad the folded tail to 128 output lanes -> lane-dense output tile.
    wt_pad = jnp.zeros((h2_dim, LANE), jnp.float32).at[:, 0].set(wt[:, 0])
    wt_pad = wt_pad.astype(compute_dtype)
    bt_pad = jnp.zeros((1, LANE), jnp.float32).at[0, 0].set(bt[0])

    # ---- batch tiling ------------------------------------------------------
    block_m = max(8, min(block_m, _round_up(B, 8)))
    b_pad = _round_up(B, block_m)
    xp = x if b_pad == B else jnp.pad(x, ((0, b_pad - B), (0, 0)))
    xp = xp.astype(compute_dtype)
    grid = (b_pad // block_m,)

    # ---- cost hint for the XLA scheduler -----------------------------------
    flops = 2 * b_pad * (in_dim * 1024 + 1024 * h2_dim + h2_dim * LANE)
    bytes_accessed = (
        xp.size * xp.dtype.itemsize
        + w1t.size * w1t.dtype.itemsize + b1r.size * 4
        + w2t.size * w2t.dtype.itemsize + b2r.size * 4
        + wt_pad.size * wt_pad.dtype.itemsize + bt_pad.size * 4
        + b_pad * LANE * 4)

    out = pl.pallas_call(
        mlp_kernel,
        out_shape=jax.ShapeDtypeStruct((b_pad, LANE), jnp.float32),
        grid_spec=pltpu.PrefetchScalarGridSpec(
            num_scalar_prefetch=0,
            grid=grid,
            in_specs=[
                pl.BlockSpec((block_m, in_dim), lambda i: (i, 0)),   # x tile
                pl.BlockSpec(w1t.shape, lambda i: (0, 0)),
                pl.BlockSpec(b1r.shape, lambda i: (0, 0)),
                pl.BlockSpec(w2t.shape, lambda i: (0, 0)),
                pl.BlockSpec(b2r.shape, lambda i: (0, 0)),
                pl.BlockSpec(wt_pad.shape, lambda i: (0, 0)),
                pl.BlockSpec(bt_pad.shape, lambda i: (0, 0)),
            ],
            out_specs=pl.BlockSpec((block_m, LANE), lambda i: (i, 0)),
        ),
        compiler_params=pltpu.CompilerParams(
            dimension_semantics=("parallel",),
            vmem_limit_bytes=32 * 1024 * 1024,
        ),
        cost_estimate=pl.CostEstimate(
            flops=flops, transcendentals=0, bytes_accessed=bytes_accessed),
    )(xp, w1t, b1r, w2t, b2r, wt_pad, bt_pad)

    # Only lane 0 of the padded output and the first B rows are valid.
    return out[:B, :1]


def init_params(key, input_size):
    """Deterministic PyTorch-Linear-style uniform init for all five layers."""
    dims = [(input_size, 1024), (1024, 128), (128, 64), (64, 16), (16, 1)]
    params = []
    for (fan_in, fan_out) in dims:
        key, kw, kb = jax.random.split(key, 3)
        bound = 1.0 / jnp.sqrt(fan_in)
        W = jax.random.uniform(kw, (fan_out, fan_in), jnp.float32,
                               minval=-bound, maxval=bound)
        b = jax.random.uniform(kb, (fan_out,), jnp.float32,
                               minval=-bound, maxval=bound)
        params.append((W, b))
    return params


def mlp_reference(x, params):
    """Original module semantics (f32, dropout == identity at inference)."""
    h = x
    for (W, b) in params:
        h = h @ W.T + b
    return h


if __name__ == "__main__":
    INPUT_SIZE = 32
    BATCH = 8

    key = jax.random.PRNGKey(0)
    key, kx = jax.random.split(key)
    x = jax.random.normal(kx, (BATCH, INPUT_SIZE), jnp.float32)
    params = init_params(key, INPUT_SIZE)

    out = jax.block_until_ready(mlp_forward(x, params))
    ref = mlp_reference(x, params)

    assert out.shape == (BATCH, 1), out.shape
    max_err = jnp.max(jnp.abs(out - ref))
    # bf16 weights/activations with f32 accumulation -> small numeric delta
    # vs the pure-f32 reference.
    assert jnp.allclose(out, ref, atol=2e-2, rtol=2e-2), \
        f"max abs err = {max_err}"

    print("KERNEL_OK")
</pallas_src>

<mosaic_0001>
module attributes {stable_mosaic.version = 11 : i64} {
  func.func @mlp_kernel(%arg0: i32, %arg1: memref<8x32xbf16, #tpu.memory_space<vmem>>, %arg2: memref<32x1024xbf16, #tpu.memory_space<vmem>>, %arg3: memref<1x1024xf32, #tpu.memory_space<vmem>>, %arg4: memref<1024x128xbf16, #tpu.memory_space<vmem>>, %arg5: memref<1x128xf32, #tpu.memory_space<vmem>>, %arg6: memref<128x128xbf16, #tpu.memory_space<vmem>>, %arg7: memref<1x128xf32, #tpu.memory_space<vmem>>, %arg8: memref<8x128xf32, #tpu.memory_space<vmem>>) attributes {dimension_semantics = [#tpu.dimension_semantics<parallel>], iteration_bounds = array<i64: 1>, scalar_prefetch = 0 : i64, scratch_operands = 0 : i64, tpu.core_type = #tpu.core_type<tc>, window_params = [{transform_indices = @transform_0, window_bounds = array<i64: 8, 32>}, {pipeline_mode = #tpu.pipeline_mode<synchronous>, transform_indices = @transform_1, window_bounds = array<i64: 32, 1024>}, {pipeline_mode = #tpu.pipeline_mode<synchronous>, transform_indices = @transform_2, window_bounds = array<i64: 1, 1024>}, {pipeline_mode = #tpu.pipeline_mode<synchronous>, transform_indices = @transform_3, window_bounds = array<i64: 1024, 128>}, {pipeline_mode = #tpu.pipeline_mode<synchronous>, transform_indices = @transform_4, window_bounds = array<i64: 1, 128>}, {pipeline_mode = #tpu.pipeline_mode<synchronous>, transform_indices = @transform_5, window_bounds = array<i64: 128, 128>}, {pipeline_mode = #tpu.pipeline_mode<synchronous>, transform_indices = @transform_6, window_bounds = array<i64: 1, 128>}, {transform_indices = @transform_7, window_bounds = array<i64: 8, 128>}]} {
    %c0 = arith.constant 0 : index
    %c0_0 = arith.constant 0 : index
    %0 = vector.load %arg1[%c0, %c0_0] : memref<8x32xbf16, #tpu.memory_space<vmem>>, vector<8x32xbf16>
    %c0_1 = arith.constant 0 : index
    %c0_2 = arith.constant 0 : index
    %1 = vector.load %arg2[%c0_1, %c0_2] : memref<32x1024xbf16, #tpu.memory_space<vmem>>, vector<32x1024xbf16>
    %cst = arith.constant dense<0.000000e+00> : vector<8x1024xf32>
    %2 = tpu.matmul %0, %1, %cst {dimension_numbers = #tpu.dot_dimension_numbers<[1], [0], [0], [1], [0, 0, 1, 1], [], []>} : vector<8x32xbf16>, vector<32x1024xbf16>, vector<8x1024xf32> -> vector<8x1024xf32>
    %c0_3 = arith.constant 0 : index
    %c0_4 = arith.constant 0 : index
    %3 = vector.load %arg3[%c0_3, %c0_4] : memref<1x1024xf32, #tpu.memory_space<vmem>>, vector<1x1024xf32>
    %4 = vector.broadcast %3 : vector<1x1024xf32> to vector<8x1024xf32>
    %5 = arith.addf %2, %4 : vector<8x1024xf32>
    %6 = arith.truncf %5 : vector<8x1024xf32> to vector<8x1024xbf16>
    %c0_5 = arith.constant 0 : index
    %c0_6 = arith.constant 0 : index
    %7 = vector.load %arg4[%c0_5, %c0_6] : memref<1024x128xbf16, #tpu.memory_space<vmem>>, vector<1024x128xbf16>
    %cst_7 = arith.constant dense<0.000000e+00> : vector<8x128xf32>
    %8 = tpu.matmul %6, %7, %cst_7 {dimension_numbers = #tpu.dot_dimension_numbers<[1], [0], [0], [1], [0, 0, 1, 1], [], []>} : vector<8x1024xbf16>, vector<1024x128xbf16>, vector<8x128xf32> -> vector<8x128xf32>
    %c0_8 = arith.constant 0 : index
    %c0_9 = arith.constant 0 : index
    %9 = vector.load %arg5[%c0_8, %c0_9] : memref<1x128xf32, #tpu.memory_space<vmem>>, vector<1x128xf32>
    %10 = vector.broadcast %9 : vector<1x128xf32> to vector<8x128xf32>
    %11 = arith.addf %8, %10 : vector<8x128xf32>
    %12 = arith.truncf %11 : vector<8x128xf32> to vector<8x128xbf16>
    %c0_10 = arith.constant 0 : index
    %c0_11 = arith.constant 0 : index
    %13 = vector.load %arg6[%c0_10, %c0_11] : memref<128x128xbf16, #tpu.memory_space<vmem>>, vector<128x128xbf16>
    %cst_12 = arith.constant dense<0.000000e+00> : vector<8x128xf32>
    %14 = tpu.matmul %12, %13, %cst_12 {dimension_numbers = #tpu.dot_dimension_numbers<[1], [0], [0], [1], [0, 0, 1, 1], [], []>} : vector<8x128xbf16>, vector<128x128xbf16>, vector<8x128xf32> -> vector<8x128xf32>
    %c0_13 = arith.constant 0 : index
    %c0_14 = arith.constant 0 : index
    %15 = vector.load %arg7[%c0_13, %c0_14] : memref<1x128xf32, #tpu.memory_space<vmem>>, vector<1x128xf32>
    %16 = vector.broadcast %15 : vector<1x128xf32> to vector<8x128xf32>
    %17 = arith.addf %14, %16 : vector<8x128xf32>
    %c0_15 = arith.constant 0 : index
    %c0_16 = arith.constant 0 : index
    %18 = vector.load %arg8[%c0_15, %c0_16] : memref<8x128xf32, #tpu.memory_space<vmem>>, vector<8x128xf32>
    tpu.vector_store %arg8[%c0_15, %c0_16], %17 {strides = array<i32>} : memref<8x128xf32, #tpu.memory_space<vmem>>, vector<8x128xf32>,
    return
  }
  func.func @transform_0(%arg0: i32) -> (i32, i32) {
    %c0_i32 = arith.constant 0 : i32
    %c0_i32_0 = arith.constant 0 : i32
    return %arg0, %c0_i32 : i32, i32
  }
  func.func @transform_1(%arg0: i32) -> (i32, i32) {
    %c0_i32 = arith.constant 0 : i32
    %c0_i32_0 = arith.constant 0 : i32
    %c0_i32_1 = arith.constant 0 : i32
    return %c0_i32, %c0_i32_0 : i32, i32
  }
  func.func @transform_2(%arg0: i32) -> (i32, i32) {
    %c0_i32 = arith.constant 0 : i32
    %c0_i32_0 = arith.constant 0 : i32
    %c0_i32_1 = arith.constant 0 : i32
    return %c0_i32, %c0_i32_0 : i32, i32
  }
  func.func @transform_3(%arg0: i32) -> (i32, i32) {
    %c0_i32 = arith.constant 0 : i32
    %c0_i32_0 = arith.constant 0 : i32
    %c0_i32_1 = arith.constant 0 : i32
    return %c0_i32, %c0_i32_0 : i32, i32
  }
  func.func @transform_4(%arg0: i32) -> (i32, i32) {
    %c0_i32 = arith.constant 0 : i32
    %c0_i32_0 = arith.constant 0 : i32
    %c0_i32_1 = arith.constant 0 : i32
    return %c0_i32, %c0_i32_0 : i32, i32
  }
  func.func @transform_5(%arg0: i32) -> (i32, i32) {
    %c0_i32 = arith.constant 0 : i32
    %c0_i32_0 = arith.constant 0 : i32
    %c0_i32_1 = arith.constant 0 : i32
    return %c0_i32, %c0_i32_0 : i32, i32
  }
  func.func @transform_6(%arg0: i32) -> (i32, i32) {
    %c0_i32 = arith.constant 0 : i32
    %c0_i32_0 = arith.constant 0 : i32
    %c0_i32_1 = arith.constant 0 : i32
    return %c0_i32, %c0_i32_0 : i32, i32
  }
  func.func @transform_7(%arg0: i32) -> (i32, i32) {
    %c0_i32 = arith.constant 0 : i32
    %c0_i32_0 = arith.constant 0 : i32
    return %arg0, %c0_i32 : i32, i32
  }
}

</mosaic_0001>

<llo_original>
// kernel: tpu_custom_call.1
$region0: #{tpu_custom_call.1}
  #allocation0 [shape = 'u32[]', space=smem, size = 0x4, offset = 0x4, fixed_abs, tag = 'smem constant byte address 0x4 - core index']
  #allocation1 [shape = 'u32[72,128]{1,0:T(1,128)}', space=vmem, size = 0x9000, scoped, tag = 'internal scratch']
  %s0 = inlined_call_operand.hbm [shape: bf16[8,32], index: 0, kind: input, shape index: {}]
  %s1 = inlined_call_operand.hbm [shape: bf16[32,1024], index: 1, kind: input, shape index: {}]
  %s2 = inlined_call_operand.hbm [shape: f32[1,1024], index: 2, kind: input, shape index: {}]
  %s3 = inlined_call_operand.hbm [shape: bf16[1024,128], index: 3, kind: input, shape index: {}]
  %s4 = inlined_call_operand.vmem [shape: f32[1,128], index: 4, kind: input, shape index: {}]
  %s5 = inlined_call_operand.hbm [shape: bf16[128,128], index: 5, kind: input, shape index: {}]
  %s6 = inlined_call_operand.vmem [shape: f32[1,128], index: 6, kind: input, shape index: {}]
  %s7 = inlined_call_operand.hbm [shape: f32[8,128], index: 7, kind: output, shape index: {}]
  %s8 = sld [smem:[#allocation0]]
  $region58: #{tpu_custom_call.1} parent=0
    _
  %s10 = ssub.s32 1, %s8
  %s11 = scalar_select 0, %s10, %s8
  $region1: #{tpu_custom_call.1} parent=0
    #allocation2 [shape = 'u8[2048]{0}', space=vmem, size = 0x800, scoped, tag = 'input window, operand 0, single buffered']
    #allocation3 [shape = 's32[1]{0}', space=sflag, size = 0x4, scoped, tag = 'scoped memory for tpu_custom_call.1']
    #allocation4 [shape = 's32[1]{0}', space=sflag, size = 0x4, scoped, tag = 'scoped memory for tpu_custom_call.1']
    #allocation5 [shape = 'u8[65536]{0}', space=vmem, size = 0x10000, scoped, tag = 'input window, operand 1, single buffered']
    #allocation6 [shape = 's32[1]{0}', space=sflag, size = 0x4, scoped, tag = 'scoped memory for tpu_custom_call.1']
    #allocation7 [shape = 'u8[4096]{0}', space=vmem, size = 0x1000, scoped, tag = 'input window, operand 2, single buffered']
    #allocation8 [shape = 'u8[262144]{0}', space=vmem, size = 0x40000, scoped, tag = 'input window, operand 3, single buffered']
    #allocation9 [shape = 's32[1]{0}', space=sflag, size = 0x4, scoped, tag = 'scoped memory for tpu_custom_call.1']
    #allocation10 [shape = 'u8[32768]{0}', space=vmem, size = 0x8000, scoped, tag = 'input window, operand 5, single buffered']
    #allocation11 [shape = 'u8[4096]{0}', space=vmem, size = 0x1000, scoped, tag = 'output window, operand 0, single buffered']
    %12 = vsyncpa [#allocation3], 0
    %13 = vsyncpa [#allocation6], 0
    %14 = vsyncpa [#allocation9], 0
    %15 = vsyncpa [#allocation4], 0
    // Predicated region
    $region2: #{tpu_custom_call.1} parent=1 // pred_check
      _
    $region3: #{tpu_custom_call.1} parent=1 // pred_check_branch
      %17 = sbr.rel (0) target = $region5
    $region4: #{tpu_custom_call.1} parent=1 // pred_region
      %19 = vsyncadd [#allocation3], 0
      %s21 = sshll.u32 %s0, 4
      %s22 = int_to_ptr.hbm [resolvable:$true] %s21
      %s23 = sshll.u32 [#allocation2], 4
      %s24 = int_to_ptr.vmem [resolvable:$true] %s23
      %26 = dma.hbm_to_vmem [thread:$0]  %s22, 64, %s24, [#allocation3]
    $region5: #{tpu_custom_call.1} parent=1 // pred_fallthru
      _
    // Predicated region
    $region6: #{tpu_custom_call.1} parent=1 // pred_check
      _
    $region7: #{tpu_custom_call.1} parent=1 // pred_check_branch
      %28 = sbr.rel (0) target = $region9
    $region8: #{tpu_custom_call.1} parent=1 // pred_region
      %30 = vsyncadd [#allocation6], 0
      %s31 = sshll.u32 %s1, 4
      %s32 = int_to_ptr.hbm [resolvable:$true] %s31
      %s33 = sshll.u32 [#allocation5], 4
      %s34 = int_to_ptr.vmem [resolvable:$true] %s33
      %39 = dma.hbm_to_vmem [thread:$0]  %s32, 2048, %s34, [#allocation6], 512, 512, 32
    $region9: #{tpu_custom_call.1} parent=1 // pred_fallthru
      _
    // Predicated region
    $region10: #{tpu_custom_call.1} parent=1 // pred_check
      _
    $region11: #{tpu_custom_call.1} parent=1 // pred_check_branch
      %41 = sbr.rel (0) target = $region13
    $region12: #{tpu_custom_call.1} parent=1 // pred_region
      %43 = vsyncadd [#allocation6], 0
      %s45 = sshll.u32 %s2, 4
      %s46 = int_to_ptr.hbm [resolvable:$true] %s45
      %s47 = sshll.u32 [#allocation7], 4
      %s48 = int_to_ptr.vmem [resolvable:$true] %s47
      %50 = dma.hbm_to_vmem [thread:$0]  %s46, 128, %s48, [#allocation6]
    $region13: #{tpu_custom_call.1} parent=1 // pred_fallthru
      _
    // Predicated region
    $region14: #{tpu_custom_call.1} parent=1 // pred_check
      _
    $region15: #{tpu_custom_call.1} parent=1 // pred_check_branch
      %52 = sbr.rel (0) target = $region17
    $region16: #{tpu_custom_call.1} parent=1 // pred_region
      %54 = vsyncadd [#allocation9], 0
      %s55 = sshll.u32 %s3, 4
      %s56 = int_to_ptr.hbm [resolvable:$true] %s55
      %s57 = sshll.u32 [#allocation8], 4
      %s58 = int_to_ptr.vmem [resolvable:$true] %s57
      %63 = dma.hbm_to_vmem [thread:$0]  %s56, 8192, %s58, [#allocation9], 64, 64, 4
    $region17: #{tpu_custom_call.1} parent=1 // pred_fallthru
      _
    // Predicated region
    $region18: #{tpu_custom_call.1} parent=1 // pred_check
      _
    $region19: #{tpu_custom_call.1} parent=1 // pred_check_branch
      %65 = sbr.rel (0) target = $region21
    $region20: #{tpu_custom_call.1} parent=1 // pred_region
      _
    $region21: #{tpu_custom_call.1} parent=1 // pred_fallthru
      _
    // Predicated region
    $region22: #{tpu_custom_call.1} parent=1 // pred_check
      _
    $region23: #{tpu_custom_call.1} parent=1 // pred_check_branch
      %67 = sbr.rel (0) target = $region25
    $region24: #{tpu_custom_call.1} parent=1 // pred_region
      %69 = vsyncadd [#allocation9], 0
      %s70 = sshll.u32 %s5, 4
      %s71 = int_to_ptr.hbm [resolvable:$true] %s70
      %s72 = sshll.u32 [#allocation10], 4
      %s73 = int_to_ptr.vmem [resolvable:$true] %s72
      %78 = dma.hbm_to_vmem [thread:$0]  %s71, 1024, %s73, [#allocation9], 64, 64, 4
    $region25: #{tpu_custom_call.1} parent=1 // pred_fallthru
      _
    // Predicated region
    $region26: #{tpu_custom_call.1} parent=1 // pred_check
      _
    $region27: #{tpu_custom_call.1} parent=1 // pred_check_branch
      %80 = sbr.rel (0) target = $region29
    $region28: #{tpu_custom_call.1} parent=1 // pred_region
      _
    $region29: #{tpu_custom_call.1} parent=1 // pred_fallthru
      _
    // Predicated region
    $region30: #{tpu_custom_call.1} parent=1 // pred_check
      _
    $region31: #{tpu_custom_call.1} parent=1 // pred_check_branch
      %82 = sbr.rel (0) target = $region33
    $region32: #{tpu_custom_call.1} parent=1 // pred_region
      %84 = dma.done [#allocation3], 64
    $region33: #{tpu_custom_call.1} parent=1 // pred_fallthru
      _
    // Predicated region
    $region34: #{tpu_custom_call.1} parent=1 // pred_check
      _
    $region35: #{tpu_custom_call.1} parent=1 // pred_check_branch
      %86 = sbr.rel (0) target = $region37
    $region36: #{tpu_custom_call.1} parent=1 // pred_region
      %88 = dma.done [#allocation6], 2048
    $region37: #{tpu_custom_call.1} parent=1 // pred_fallthru
      _
    // Predicated region
    $region38: #{tpu_custom_call.1} parent=1 // pred_check
      _
    $region39: #{tpu_custom_call.1} parent=1 // pred_check_branch
      %90 = sbr.rel (0) target = $region41
    $region40: #{tpu_custom_call.1} parent=1 // pred_region
      %92 = dma.done [#allocation6], 128
    $region41: #{tpu_custom_call.1} parent=1 // pred_fallthru
      _
    // Predicated region
    $region42: #{tpu_custom_call.1} parent=1 // pred_check
      _
    $region43: #{tpu_custom_call.1} parent=1 // pred_check_branch
      %94 = sbr.rel (0) target = $region45
    $region44: #{tpu_custom_call.1} parent=1 // pred_region
      %96 = dma.done [#allocation9], 8192
    $region45: #{tpu_custom_call.1} parent=1 // pred_fallthru
      _
    // Predicated region
    $region46: #{tpu_custom_call.1} parent=1 // pred_check
      _
    $region47: #{tpu_custom_call.1} parent=1 // pred_check_branch
      %98 = sbr.rel (0) target = $region49
    $region48: #{tpu_custom_call.1} parent=1 // pred_region
      %100 = dma.done [#allocation9], 1024
    $region49: #{tpu_custom_call.1} parent=1 // pred_fallthru
      _
    %v102 = vld [vmem:[#allocation2] sm:$0xf]
    %v103 = vld [vmem:[#allocation5] sm:$0xff]
    %v104 = vld [vmem:[#allocation5 + $0x8] sm:$0xff]
    %v105 = vld [vmem:[#allocation5 + $0x10] sm:$0xff]
    %v106 = vld [vmem:[#allocation5 + $0x18] sm:$0xff]
    %v107 = vld [vmem:[#allocation5 + $0x20] sm:$0xff]
    %v108 = vld [vmem:[#allocation5 + $0x28] sm:$0xff]
    %v109 = vld [vmem:[#allocation5 + $0x30] sm:$0xff]
    %v110 = vld [vmem:[#allocation5 + $0x38] sm:$0xff]
    %v111 = vld [vmem:[#allocation5 + $0x40] sm:$0xff]
    %v112 = vld [vmem:[#allocation5 + $0x48] sm:$0xff]
    %v113 = vld [vmem:[#allocation5 + $0x50] sm:$0xff]
    %v114 = vld [vmem:[#allocation5 + $0x58] sm:$0xff]
    %v115 = vld [vmem:[#allocation5 + $0x60] sm:$0xff]
    %v116 = vld [vmem:[#allocation5 + $0x68] sm:$0xff]
    %v117 = vld [vmem:[#allocation5 + $0x70] sm:$0xff]
    %v118 = vld [vmem:[#allocation5 + $0x78] sm:$0xff]
    %v119 = vld [vmem:[#allocation7] sm:$0xff]
    %v121 = vperm.slane %v119, 0
    %v122 = vperm.slane %v119, 1
    %v123 = vperm.slane %v119, 2
    %v124 = vperm.slane %v119, 3
    %v125 = vperm.slane %v119, 4
    %v126 = vperm.slane %v119, 5
    %v127 = vperm.slane %v119, 6
    %v128 = vperm.slane %v119, 7
    %v153 = vunpack.c.l.b16 %v103
    %v154 = vunpack.c.h.b16 %v103
    %v155 = vunpack.c.l.b16 %v104
    %v156 = vunpack.c.h.b16 %v104
    %v157 = vunpack.c.l.b16 %v105
    %v158 = vunpack.c.h.b16 %v105
    %v159 = vunpack.c.l.b16 %v106
    %v160 = vunpack.c.h.b16 %v106
    %v161 = vunpack.c.l.b16 %v107
    %v162 = vunpack.c.h.b16 %v107
    %v163 = vunpack.c.l.b16 %v108
    %v164 = vunpack.c.h.b16 %v108
    %v165 = vunpack.c.l.b16 %v109
    %v166 = vunpack.c.h.b16 %v109
    %v167 = vunpack.c.l.b16 %v110
    %v168 = vunpack.c.h.b16 %v110
    %v169 = vunpack.c.l.b16 %v111
    %v170 = vunpack.c.h.b16 %v111
    %v171 = vunpack.c.l.b16 %v112
    %v172 = vunpack.c.h.b16 %v112
    %v173 = vunpack.c.l.b16 %v113
    %v174 = vunpack.c.h.b16 %v113
    %v175 = vunpack.c.l.b16 %v114
    %v176 = vunpack.c.h.b16 %v114
    %v177 = vunpack.c.l.b16 %v115
    %v178 = vunpack.c.h.b16 %v115
    %v179 = vunpack.c.l.b16 %v116
    %v180 = vunpack.c.h.b16 %v116
    %v181 = vunpack.c.l.b16 %v117
    %v182 = vunpack.c.h.b16 %v117
    %v183 = vunpack.c.l.b16 %v118
    %v184 = vunpack.c.h.b16 %v118
    %v185 = vpack.c.b16 %v161, %v153
    %v186 = vpack.c.b16 %v162, %v154
    %v187 = vpack.c.b16 %v163, %v155
    %v188 = vpack.c.b16 %v164, %v156
    %v189 = vpack.c.b16 %v165, %v157
    %v190 = vpack.c.b16 %v166, %v158
    %v191 = vpack.c.b16 %v167, %v159
    %v192 = vpack.c.b16 %v168, %v160
    %v193 = vpack.c.b16 %v177, %v169
    %v194 = vpack.c.b16 %v178, %v170
    %v195 = vpack.c.b16 %v179, %v171
    %v196 = vpack.c.b16 %v180, %v172
    %v197 = vpack.c.b16 %v181, %v173
    %v198 = vpack.c.b16 %v182, %v174
    %v199 = vpack.c.b16 %v183, %v175
    %v200 = vpack.c.b16 %v184, %v176
    %vm217 = vcmask 261120
    %v219 = vsel %vm217, %v102, 0
    %221 = vmatpush.bf16.msra.mxu0 0
    %222 = vmatpush.bf16.msra.mxu0 0
    %223 = vmatpush.bf16.msra.mxu0 0
    %224 = vmatpush.bf16.msra.mxu0 0
    %225 = vmatpush.bf16.msra.mxu0 0
    %226 = vmatpush.bf16.msra.mxu0 0
    %227 = vmatpush.bf16.msra.mxu0 %v193
    %228 = vmatpush.bf16.msra.mxu0 %v185
    %229 = vmatmul.bf16.gmra.mxu0 %v219
    %v230 = vpop.f32.mrf.mxu0
    %v231 = vadd.f32 %v121, %v230
    %v232 = vpop.f32.mrf.mxu0
    %233 = vdwg.mxu0
    %234 = vmatpush.bf16.msra.mxu0 0
    %235 = vmatpush.bf16.msra.mxu0 0
    %236 = vmatpush.bf16.msra.mxu0 0
    %237 = vmatpush.bf16.msra.mxu0 0
    %238 = vmatpush.bf16.msra.mxu0 0
    %239 = vmatpush.bf16.msra.mxu0 0
    %240 = vmatpush.bf16.msra.mxu0 %v194
    %241 = vmatpush.bf16.msra.mxu0 %v186
    %242 = vmatmul.bf16.gmra.mxu0 %v219
    %v243 = vpop.f32.mrf.mxu0
    %v244 = vadd.f32 %v122, %v243
    %v245 = vpop.f32.mrf.mxu0
    %246 = vdwg.mxu0
    %247 = vmatpush.bf16.msra.mxu0 0
    %248 = vmatpush.bf16.msra.mxu0 0
    %249 = vmatpush.bf16.msra.mxu0 0
    %250 = vmatpush.bf16.msra.mxu0 0
    %251 = vmatpush.bf16.msra.mxu0 0
    %252 = vmatpush.bf16.msra.mxu0 0
    %253 = vmatpush.bf16.msra.mxu0 %v195
    %254 = vmatpush.bf16.msra.mxu0 %v187
    %255 = vmatmul.bf16.gmra.mxu0 %v219
    %v256 = vpop.f32.mrf.mxu0
    %v257 = vadd.f32 %v123, %v256
    %v258 = vpop.f32.mrf.mxu0
    %259 = vdwg.mxu0
    %260 = vmatpush.bf16.msra.mxu0 0
    %261 = vmatpush.bf16.msra.mxu0 0
    %262 = vmatpush.bf16.msra.mxu0 0
    %263 = vmatpush.bf16.msra.mxu0 0
    %264 = vmatpush.bf16.msra.mxu0 0
    %265 = vmatpush.bf16.msra.mxu0 0
    %266 = vmatpush.bf16.msra.mxu0 %v196
    %267 = vmatpush.bf16.msra.mxu0 %v188
    %268 = vmatmul.bf16.gmra.mxu0 %v219
    %v269 = vpop.f32.mrf.mxu0
    %v270 = vadd.f32 %v124, %v269
    %v271 = vpop.f32.mrf.mxu0
    %272 = vdwg.mxu0
    %273 = vmatpush.bf16.msra.mxu0 0
    %274 = vmatpush.bf16.msra.mxu0 0
    %275 = vmatpush.bf16.msra.mxu0 0
    %276 = vmatpush.bf16.msra.mxu0 0
    %277 = vmatpush.bf16.msra.mxu0 0
    %278 = vmatpush.bf16.msra.mxu0 0
    %279 = vmatpush.bf16.msra.mxu0 %v197
    %280 = vmatpush.bf16.msra.mxu0 %v189
    %281 = vmatmul.bf16.gmra.mxu0 %v219
    %v282 = vpop.f32.mrf.mxu0
    %v283 = vadd.f32 %v125, %v282
    %v284 = vpop.f32.mrf.mxu0
    %285 = vdwg.mxu0
    %286 = vmatpush.bf16.msra.mxu0 0
    %287 = vmatpush.bf16.msra.mxu0 0
    %288 = vmatpush.bf16.msra.mxu0 0
    %289 = vmatpush.bf16.msra.mxu0 0
    %290 = vmatpush.bf16.msra.mxu0 0
    %291 = vmatpush.bf16.msra.mxu0 0
    %292 = vmatpush.bf16.msra.mxu0 %v198
    %293 = vmatpush.bf16.msra.mxu0 %v190
    %294 = vmatmul.bf16.gmra.mxu0 %v219
    %v295 = vpop.f32.mrf.mxu0
    %v296 = vadd.f32 %v126, %v295
    %v297 = vpop.f32.mrf.mxu0
    %298 = vdwg.mxu0
    %299 = vmatpush.bf16.msra.mxu0 0
    %300 = vmatpush.bf16.msra.mxu0 0
    %301 = vmatpush.bf16.msra.mxu0 0
    %302 = vmatpush.bf16.msra.mxu0 0
    %303 = vmatpush.bf16.msra.mxu0 0
    %304 = vmatpush.bf16.msra.mxu0 0
    %305 = vmatpush.bf16.msra.mxu0 %v199
    %306 = vmatpush.bf16.msra.mxu0 %v191
    %307 = vmatmul.bf16.gmra.mxu0 %v219
    %v308 = vpop.f32.mrf.mxu0
    %v309 = vadd.f32 %v127, %v308
    %v310 = vpop.f32.mrf.mxu0
    %311 = vdwg.mxu0
    %312 = vmatpush.bf16.msra.mxu0 0
    %313 = vmatpush.bf16.msra.mxu0 0
    %314 = vmatpush.bf16.msra.mxu0 0
    %315 = vmatpush.bf16.msra.mxu0 0
    %316 = vmatpush.bf16.msra.mxu0 0
    %317 = vmatpush.bf16.msra.mxu0 0
    %318 = vmatpush.bf16.msra.mxu0 %v200
    %319 = vmatpush.bf16.msra.mxu0 %v192
    %320 = vmatmul.bf16.gmra.mxu0 %v219
    %v321 = vpop.f32.mrf.mxu0
    %v322 = vadd.f32 %v128, %v321
    %v323 = vpop.f32.mrf.mxu0
    %324 = vdwg.mxu0
    %v325 = vpack.c.bf16 %v231, %v231
    %v326 = vpack.c.bf16 %v244, %v244
    %v327 = vpack.c.bf16 %v257, %v257
    %v328 = vpack.c.bf16 %v270, %v270
    %v329 = vpack.c.bf16 %v283, %v283
    %v330 = vpack.c.bf16 %v296, %v296
    %v331 = vpack.c.bf16 %v309, %v309
    %v332 = vpack.c.bf16 %v322, %v322
    %v333 = vld [vmem:[#allocation8] sm:$0xf]
    %v334 = vld [vmem:[#allocation8 + $0x4] sm:$0xf]
    %v335 = vld [vmem:[#allocation8 + $0x8] sm:$0xf]
    %v336 = vld [vmem:[#allocation8 + $0xc] sm:$0xf]
    %v337 = vld [vmem:[#allocation8 + $0x10] sm:$0xf]
    %v338 = vld [vmem:[#allocation8 + $0x14] sm:$0xf]
    %v339 = vld [vmem:[#allocation8 + $0x18] sm:$0xf]
    %v340 = vld [vmem:[#allocation8 + $0x1c] sm:$0xf]
    %v341 = vld [vmem:[#allocation8 + $0x20] sm:$0xf]
    %v342 = vld [vmem:[#allocation8 + $0x24] sm:$0xf]
    %v343 = vld [vmem:[#allocation8 + $0x28] sm:$0xf]
    %v344 = vld [vmem:[#allocation8 + $0x2c] sm:$0xf]
    %v345 = vld [vmem:[#allocation8 + $0x30] sm:$0xf]
    %v346 = vld [vmem:[#allocation8 + $0x34] sm:$0xf]
    %v347 = vld [vmem:[#allocation8 + $0x38] sm:$0xf]
    %v348 = vld [vmem:[#allocation8 + $0x3c] sm:$0xf]
    %v349 = vld [vmem:[#allocation8 + $0x40] sm:$0xf]
    %v350 = vld [vmem:[#allocation8 + $0x44] sm:$0xf]
    %v351 = vld [vmem:[#allocation8 + $0x48] sm:$0xf]
    %v352 = vld [vmem:[#allocation8 + $0x4c] sm:$0xf]
    %v353 = vld [vmem:[#allocation8 + $0x50] sm:$0xf]
    %v354 = vld [vmem:[#allocation8 + $0x54] sm:$0xf]
    %v355 = vld [vmem:[#allocation8 + $0x58] sm:$0xf]
    %v356 = vld [vmem:[#allocation8 + $0x5c] sm:$0xf]
    %v357 = vld [vmem:[#allocation8 + $0x60] sm:$0xf]
    %v358 = vld [vmem:[#allocation8 + $0x64] sm:$0xf]
    %v359 = vld [vmem:[#allocation8 + $0x68] sm:$0xf]
    %v360 = vld [vmem:[#allocation8 + $0x6c] sm:$0xf]
    %v361 = vld [vmem:[#allocation8 + $0x70] sm:$0xf]
    %v362 = vld [vmem:[#allocation8 + $0x74] sm:$0xf]
    %v363 = vld [vmem:[#allocation8 + $0x78] sm:$0xf]
    %v364 = vld [vmem:[#allocation8 + $0x7c] sm:$0xf]
    %v365 = vld [vmem:[#allocation8 + $0x80] sm:$0xf]
    %v366 = vld [vmem:[#allocation8 + $0x84] sm:$0xf]
    %v367 = vld [vmem:[#allocation8 + $0x88] sm:$0xf]
    %v368 = vld [vmem:[#allocation8 + $0x8c] sm:$0xf]
    %v369 = vld [vmem:[#allocation8 + $0x90] sm:$0xf]
    %v370 = vld [vmem:[#allocation8 + $0x94] sm:$0xf]
    %v371 = vld [vmem:[#allocation8 + $0x98] sm:$0xf]
    %v372 = vld [vmem:[#allocation8 + $0x9c] sm:$0xf]
    %v373 = vld [vmem:[#allocation8 + $0xa0] sm:$0xf]
    %v374 = vld [vmem:[#allocation8 + $0xa4] sm:$0xf]
    %v375 = vld [vmem:[#allocation8 + $0xa8] sm:$0xf]
    %v376 = vld [vmem:[#allocation8 + $0xac] sm:$0xf]
    %v377 = vld [vmem:[#allocation8 + $0xb0] sm:$0xf]
    %v378 = vld [vmem:[#allocation8 + $0xb4] sm:$0xf]
    %v379 = vld [vmem:[#allocation8 + $0xb8] sm:$0xf]
    %v380 = vld [vmem:[#allocation8 + $0xbc] sm:$0xf]
    %v381 = vld [vmem:[#allocation8 + $0xc0] sm:$0xf]
    %v382 = vld [vmem:[#allocation8 + $0xc4] sm:$0xf]
    %v383 = vld [vmem:[#allocation8 + $0xc8] sm:$0xf]
    %v384 = vld [vmem:[#allocation8 + $0xcc] sm:$0xf]
    %v385 = vld [vmem:[#allocation8 + $0xd0] sm:$0xf]
    %v386 = vld [vmem:[#allocation8 + $0xd4] sm:$0xf]
    %v387 = vld [vmem:[#allocation8 + $0xd8] sm:$0xf]
    %v388 = vld [vmem:[#allocation8 + $0xdc] sm:$0xf]
    %v389 = vld [vmem:[#allocation8 + $0xe0] sm:$0xf]
    %v390 = vld [vmem:[#allocation8 + $0xe4] sm:$0xf]
    %v391 = vld [vmem:[#allocation8 + $0xe8] sm:$0xf]
    %v392 = vld [vmem:[#allocation8 + $0xec] sm:$0xf]
    %v393 = vld [vmem:[#allocation8 + $0xf0] sm:$0xf]
    %v394 = vld [vmem:[#allocation8 + $0xf4] sm:$0xf]
    %v395 = vld [vmem:[#allocation8 + $0xf8] sm:$0xf]
    %v396 = vld [vmem:[#allocation8 + $0xfc] sm:$0xf]
    %v397 = vld [vmem:[#allocation8 + $0x100] sm:$0xf]
    %v398 = vld [vmem:[#allocation8 + $0x104] sm:$0xf]
    %v399 = vld [vmem:[#allocation8 + $0x108] sm:$0xf]
    %v400 = vld [vmem:[#allocation8 + $0x10c] sm:$0xf]
    %v401 = vld [vmem:[#allocation8 + $0x110] sm:$0xf]
    %v402 = vld [vmem:[#allocation8 + $0x114] sm:$0xf]
    %v403 = vld [vmem:[#allocation8 + $0x118] sm:$0xf]
    %v404 = vld [vmem:[#allocation8 + $0x11c] sm:$0xf]
    %v405 = vld [vmem:[#allocation8 + $0x120] sm:$0xf]
    %v406 = vld [vmem:[#allocation8 + $0x124] sm:$0xf]
    %v407 = vld [vmem:[#allocation8 + $0x128] sm:$0xf]
    %v408 = vld [vmem:[#allocation8 + $0x12c] sm:$0xf]
    %v409 = vld [vmem:[#allocation8 + $0x130] sm:$0xf]
    %v410 = vld [vmem:[#allocation8 + $0x134] sm:$0xf]
    %v411 = vld [vmem:[#allocation8 + $0x138] sm:$0xf]
    %v412 = vld [vmem:[#allocation8 + $0x13c] sm:$0xf]
    %v413 = vld [vmem:[#allocation8 + $0x140] sm:$0xf]
    %v414 = vld [vmem:[#allocation8 + $0x144] sm:$0xf]
    %v415 = vld [vmem:[#allocation8 + $0x148] sm:$0xf]
    %v416 = vld [vmem:[#allocation8 + $0x14c] sm:$0xf]
    %v417 = vld [vmem:[#allocation8 + $0x150] sm:$0xf]
    %v418 = vld [vmem:[#allocation8 + $0x154] sm:$0xf]
    %v419 = vld [vmem:[#allocation8 + $0x158] sm:$0xf]
    %v420 = vld [vmem:[#allocation8 + $0x15c] sm:$0xf]
    %v421 = vld [vmem:[#allocation8 + $0x160] sm:$0xf]
    %v422 = vld [vmem:[#allocation8 + $0x164] sm:$0xf]
    %v423 = vld [vmem:[#allocation8 + $0x168] sm:$0xf]
    %v424 = vld [vmem:[#allocation8 + $0x16c] sm:$0xf]
    %v425 = vld [vmem:[#allocation8 + $0x170] sm:$0xf]
    %v426 = vld [vmem:[#allocation8 + $0x174] sm:$0xf]
    %v427 = vld [vmem:[#allocation8 + $0x178] sm:$0xf]
    %v428 = vld [vmem:[#allocation8 + $0x17c] sm:$0xf]
    %v429 = vld [vmem:[#allocation8 + $0x180] sm:$0xf]
    %v430 = vld [vmem:[#allocation8 + $0x184] sm:$0xf]
    %v431 = vld [vmem:[#allocation8 + $0x188] sm:$0xf]
    %v432 = vld [vmem:[#allocation8 + $0x18c] sm:$0xf]
    %v433 = vld [vmem:[#allocation8 + $0x190] sm:$0xf]
    %v434 = vld [vmem:[#allocation8 + $0x194] sm:$0xf]
    %v435 = vld [vmem:[#allocation8 + $0x198] sm:$0xf]
    %v436 = vld [vmem:[#allocation8 + $0x19c] sm:$0xf]
    %v437 = vld [vmem:[#allocation8 + $0x1a0] sm:$0xf]
    %v438 = vld [vmem:[#allocation8 + $0x1a4] sm:$0xf]
    %v439 = vld [vmem:[#allocation8 + $0x1a8] sm:$0xf]
    %v440 = vld [vmem:[#allocation8 + $0x1ac] sm:$0xf]
    %v441 = vld [vmem:[#allocation8 + $0x1b0] sm:$0xf]
    %v442 = vld [vmem:[#allocation8 + $0x1b4] sm:$0xf]
    %v443 = vld [vmem:[#allocation8 + $0x1b8] sm:$0xf]
    %v444 = vld [vmem:[#allocation8 + $0x1bc] sm:$0xf]
    %v445 = vld [vmem:[#allocation8 + $0x1c0] sm:$0xf]
    %v446 = vld [vmem:[#allocation8 + $0x1c4] sm:$0xf]
    %v447 = vld [vmem:[#allocation8 + $0x1c8] sm:$0xf]
    %v448 = vld [vmem:[#allocation8 + $0x1cc] sm:$0xf]
    %v449 = vld [vmem:[#allocation8 + $0x1d0] sm:$0xf]
    %v450 = vld [vmem:[#allocation8 + $0x1d4] sm:$0xf]
    %v451 = vld [vmem:[#allocation8 + $0x1d8] sm:$0xf]
    %v452 = vld [vmem:[#allocation8 + $0x1dc] sm:$0xf]
    %v453 = vld [vmem:[#allocation8 + $0x1e0] sm:$0xf]
    %v454 = vld [vmem:[#allocation8 + $0x1e4] sm:$0xf]
    %v455 = vld [vmem:[#allocation8 + $0x1e8] sm:$0xf]
    %v456 = vld [vmem:[#allocation8 + $0x1ec] sm:$0xf]
    %v457 = vld [vmem:[#allocation8 + $0x1f0] sm:$0xf]
    %v458 = vld [vmem:[#allocation8 + $0x1f4] sm:$0xf]
    %v459 = vld [vmem:[#allocation8 + $0x1f8] sm:$0xf]
    %v460 = vld [vmem:[#allocation8 + $0x1fc] sm:$0xf]
    %v461 = vld [vmem:[%s4] sm:$0x1]
    %v463 = vperm.slane %v461, 0
    %v593 = vunpack.c.l.b16 %v333
    %v594 = vunpack.c.l.b16 %v334
    %v595 = vunpack.c.l.b16 %v335
    %v596 = vunpack.c.l.b16 %v336
    %v597 = vunpack.c.l.b16 %v337
    %v598 = vunpack.c.l.b16 %v338
    %v599 = vunpack.c.l.b16 %v339
    %v600 = vunpack.c.l.b16 %v340
    %v601 = vunpack.c.l.b16 %v341
    %v602 = vunpack.c.l.b16 %v342
    %v603 = vunpack.c.l.b16 %v343
    %v604 = vunpack.c.l.b16 %v344
    %v605 = vunpack.c.l.b16 %v345
    %v606 = vunpack.c.l.b16 %v346
    %v607 = vunpack.c.l.b16 %v347
    %v608 = vunpack.c.l.b16 %v348
    %v609 = vunpack.c.l.b16 %v349
    %v610 = vunpack.c.l.b16 %v350
    %v611 = vunpack.c.l.b16 %v351
    %v612 = vunpack.c.l.b16 %v352
    %v613 = vunpack.c.l.b16 %v353
    %v614 = vunpack.c.l.b16 %v354
    %v615 = vunpack.c.l.b16 %v355
    %v616 = vunpack.c.l.b16 %v356
    %v617 = vunpack.c.l.b16 %v357
    %v618 = vunpack.c.l.b16 %v358
    %v619 = vunpack.c.l.b16 %v359
    %v620 = vunpack.c.l.b16 %v360
    %v621 = vunpack.c.l.b16 %v361
    %v622 = vunpack.c.l.b16 %v362
    %v623 = vunpack.c.l.b16 %v363
    %v624 = vunpack.c.l.b16 %v364
    %v625 = vunpack.c.l.b16 %v365
    %v626 = vunpack.c.l.b16 %v366
    %v627 = vunpack.c.l.b16 %v367
    %v628 = vunpack.c.l.b16 %v368
    %v629 = vunpack.c.l.b16 %v369
    %v630 = vunpack.c.l.b16 %v370
    %v631 = vunpack.c.l.b16 %v371
    %v632 = vunpack.c.l.b16 %v372
    %v633 = vunpack.c.l.b16 %v373
    %v634 = vunpack.c.l.b16 %v374
    %v635 = vunpack.c.l.b16 %v375
    %v636 = vunpack.c.l.b16 %v376
    %v637 = vunpack.c.l.b16 %v377
    %v638 = vunpack.c.l.b16 %v378
    %v639 = vunpack.c.l.b16 %v379
    %v640 = vunpack.c.l.b16 %v380
    %v641 = vunpack.c.l.b16 %v381
    %v642 = vunpack.c.l.b16 %v382
    %v643 = vunpack.c.l.b16 %v383
    %v644 = vunpack.c.l.b16 %v384
    %v645 = vunpack.c.l.b16 %v385
    %v646 = vunpack.c.l.b16 %v386
    %v647 = vunpack.c.l.b16 %v387
    %v648 = vunpack.c.l.b16 %v388
    %v649 = vunpack.c.l.b16 %v389
    %v650 = vunpack.c.l.b16 %v390
    %v651 = vunpack.c.l.b16 %v391
    %v652 = vunpack.c.l.b16 %v392
    %v653 = vunpack.c.l.b16 %v393
    %v654 = vunpack.c.l.b16 %v394
    %v655 = vunpack.c.l.b16 %v395
    %v656 = vunpack.c.l.b16 %v396
    %v657 = vunpack.c.l.b16 %v397
    %v658 = vunpack.c.l.b16 %v398
    %v659 = vunpack.c.l.b16 %v399
    %v660 = vunpack.c.l.b16 %v400
    %v661 = vunpack.c.l.b16 %v401
    %v662 = vunpack.c.l.b16 %v402
    %v663 = vunpack.c.l.b16 %v403
    %v664 = vunpack.c.l.b16 %v404
    %v665 = vunpack.c.l.b16 %v405
    %v666 = vunpack.c.l.b16 %v406
    %v667 = vunpack.c.l.b16 %v407
    %v668 = vunpack.c.l.b16 %v408
    %v669 = vunpack.c.l.b16 %v409
    %v670 = vunpack.c.l.b16 %v410
    %v671 = vunpack.c.l.b16 %v411
    %v672 = vunpack.c.l.b16 %v412
    %v673 = vunpack.c.l.b16 %v413
    %v674 = vunpack.c.l.b16 %v414
    %v675 = vunpack.c.l.b16 %v415
    %v676 = vunpack.c.l.b16 %v416
    %v677 = vunpack.c.l.b16 %v417
    %v678 = vunpack.c.l.b16 %v418
    %v679 = vunpack.c.l.b16 %v419
    %v680 = vunpack.c.l.b16 %v420
    %v681 = vunpack.c.l.b16 %v421
    %v682 = vunpack.c.l.b16 %v422
    %v683 = vunpack.c.l.b16 %v423
    %v684 = vunpack.c.l.b16 %v424
    %v685 = vunpack.c.l.b16 %v425
    %v686 = vunpack.c.l.b16 %v426
    %v687 = vunpack.c.l.b16 %v427
    %v688 = vunpack.c.l.b16 %v428
    %v689 = vunpack.c.l.b16 %v429
    %v690 = vunpack.c.l.b16 %v430
    %v691 = vunpack.c.l.b16 %v431
    %v692 = vunpack.c.l.b16 %v432
    %v693 = vunpack.c.l.b16 %v433
    %v694 = vunpack.c.l.b16 %v434
    %v695 = vunpack.c.l.b16 %v435
    %v696 = vunpack.c.l.b16 %v436
    %v697 = vunpack.c.l.b16 %v437
    %v698 = vunpack.c.l.b16 %v438
    %v699 = vunpack.c.l.b16 %v439
    %v700 = vunpack.c.l.b16 %v440
    %v701 = vunpack.c.l.b16 %v441
    %v702 = vunpack.c.l.b16 %v442
    %v703 = vunpack.c.l.b16 %v443
    %v704 = vunpack.c.l.b16 %v444
    %v705 = vunpack.c.l.b16 %v445
    %v706 = vunpack.c.l.b16 %v446
    %v707 = vunpack.c.l.b16 %v447
    %v708 = vunpack.c.l.b16 %v448
    %v709 = vunpack.c.l.b16 %v449
    %v710 = vunpack.c.l.b16 %v450
    %v711 = vunpack.c.l.b16 %v451
    %v712 = vunpack.c.l.b16 %v452
    %v713 = vunpack.c.l.b16 %v453
    %v714 = vunpack.c.l.b16 %v454
    %v715 = vunpack.c.l.b16 %v455
    %v716 = vunpack.c.l.b16 %v456
    %v717 = vunpack.c.l.b16 %v457
    %v718 = vunpack.c.l.b16 %v458
    %v719 = vunpack.c.l.b16 %v459
    %v720 = vunpack.c.l.b16 %v460
    %v721 = vpack.c.b16 %v594, %v593
    %v722 = vpack.c.b16 %v596, %v595
    %v723 = vpack.c.b16 %v598, %v597
    %v724 = vpack.c.b16 %v600, %v599
    %v725 = vpack.c.b16 %v602, %v601
    %v726 = vpack.c.b16 %v604, %v603
    %v727 = vpack.c.b16 %v606, %v605
    %v728 = vpack.c.b16 %v608, %v607
    %v729 = vpack.c.b16 %v610, %v609
    %v730 = vpack.c.b16 %v612, %v611
    %v731 = vpack.c.b16 %v614, %v613
    %v732 = vpack.c.b16 %v616, %v615
    %v733 = vpack.c.b16 %v618, %v617
    %v734 = vpack.c.b16 %v620, %v619
    %v735 = vpack.c.b16 %v622, %v621
    %v736 = vpack.c.b16 %v624, %v623
    %v737 = vpack.c.b16 %v626, %v625
    %v738 = vpack.c.b16 %v628, %v627
    %v739 = vpack.c.b16 %v630, %v629
    %v740 = vpack.c.b16 %v632, %v631
    %v741 = vpack.c.b16 %v634, %v633
    %v742 = vpack.c.b16 %v636, %v635
    %v743 = vpack.c.b16 %v638, %v637
    %v744 = vpack.c.b16 %v640, %v639
    %v745 = vpack.c.b16 %v642, %v641
    %v746 = vpack.c.b16 %v644, %v643
    %v747 = vpack.c.b16 %v646, %v645
    %v748 = vpack.c.b16 %v648, %v647
    %v749 = vpack.c.b16 %v650, %v649
    %v750 = vpack.c.b16 %v652, %v651
    %v751 = vpack.c.b16 %v654, %v653
    %v752 = vpack.c.b16 %v656, %v655
    %v753 = vpack.c.b16 %v658, %v657
    %v754 = vpack.c.b16 %v660, %v659
    %v755 = vpack.c.b16 %v662, %v661
    %v756 = vpack.c.b16 %v664, %v663
    %v757 = vpack.c.b16 %v666, %v665
    %v758 = vpack.c.b16 %v668, %v667
    %v759 = vpack.c.b16 %v670, %v669
    %v760 = vpack.c.b16 %v672, %v671
    %v761 = vpack.c.b16 %v674, %v673
    %v762 = vpack.c.b16 %v676, %v675
    %v763 = vpack.c.b16 %v678, %v677
    %v764 = vpack.c.b16 %v680, %v679
    %v765 = vpack.c.b16 %v682, %v681
    %v766 = vpack.c.b16 %v684, %v683
    %v767 = vpack.c.b16 %v686, %v685
    %v768 = vpack.c.b16 %v688, %v687
    %v769 = vpack.c.b16 %v690, %v689
    %v770 = vpack.c.b16 %v692, %v691
    %v771 = vpack.c.b16 %v694, %v693
    %v772 = vpack.c.b16 %v696, %v695
    %v773 = vpack.c.b16 %v698, %v697
    %v774 = vpack.c.b16 %v700, %v699
    %v775 = vpack.c.b16 %v702, %v701
    %v776 = vpack.c.b16 %v704, %v703
    %v777 = vpack.c.b16 %v706, %v705
    %v778 = vpack.c.b16 %v708, %v707
    %v779 = vpack.c.b16 %v710, %v709
    %v780 = vpack.c.b16 %v712, %v711
    %v781 = vpack.c.b16 %v714, %v713
    %v782 = vpack.c.b16 %v716, %v715
    %v783 = vpack.c.b16 %v718, %v717
    %v784 = vpack.c.b16 %v720, %v719
    %849 = vmatpush.bf16.msra.mxu0 %v728
    %850 = vmatpush.bf16.msra.mxu0 %v727
    %851 = vmatpush.bf16.msra.mxu0 %v726
    %852 = vmatpush.bf16.msra.mxu0 %v725
    %853 = vmatpush.bf16.msra.mxu0 %v724
    %854 = vmatpush.bf16.msra.mxu0 %v723
    %855 = vmatpush.bf16.msra.mxu0 %v722
    %856 = vmatpush.bf16.msra.mxu0 %v721
    %857 = vmatmul.bf16.gmra.mxu0 %v325
    %v858 = vpop.f32.mrf.mxu0
    %v859 = vadd.f32 %v463, %v858
    %v860 = vpop.f32.mrf.mxu0
    %861 = vdwg.mxu0
    %862 = vmatpush.bf16.msra.mxu0 %v736
    %863 = vmatpush.bf16.msra.mxu0 %v735
    %864 = vmatpush.bf16.msra.mxu0 %v734
    %865 = vmatpush.bf16.msra.mxu0 %v733
    %866 = vmatpush.bf16.msra.mxu0 %v732
    %867 = vmatpush.bf16.msra.mxu0 %v731
    %868 = vmatpush.bf16.msra.mxu0 %v730
    %869 = vmatpush.bf16.msra.mxu0 %v729
    %870 = vmatmul.bf16.gmra.mxu0 %v326
    %v871 = vpop.f32.mrf.mxu0
    %v872 = vadd.f32 %v859, %v871
    %v873 = vpop.f32.mrf.mxu0
    %874 = vdwg.mxu0
    %875 = vmatpush.bf16.msra.mxu0 %v744
    %876 = vmatpush.bf16.msra.mxu0 %v743
    %877 = vmatpush.bf16.msra.mxu0 %v742
    %878 = vmatpush.bf16.msra.mxu0 %v741
    %879 = vmatpush.bf16.msra.mxu0 %v740
    %880 = vmatpush.bf16.msra.mxu0 %v739
    %881 = vmatpush.bf16.msra.mxu0 %v738
    %882 = vmatpush.bf16.msra.mxu0 %v737
    %883 = vmatmul.bf16.gmra.mxu0 %v327
    %v884 = vpop.f32.mrf.mxu0
    %v885 = vadd.f32 %v872, %v884
    %v886 = vpop.f32.mrf.mxu0
    %887 = vdwg.mxu0
    %888 = vmatpush.bf16.msra.mxu0 %v752
    %889 = vmatpush.bf16.msra.mxu0 %v751
    %890 = vmatpush.bf16.msra.mxu0 %v750
    %891 = vmatpush.bf16.msra.mxu0 %v749
    %892 = vmatpush.bf16.msra.mxu0 %v748
    %893 = vmatpush.bf16.msra.mxu0 %v747
    %894 = vmatpush.bf16.msra.mxu0 %v746
    %895 = vmatpush.bf16.msra.mxu0 %v745
    %896 = vmatmul.bf16.gmra.mxu0 %v328
    %v897 = vpop.f32.mrf.mxu0
    %v898 = vadd.f32 %v885, %v897
    %v899 = vpop.f32.mrf.mxu0
    %900 = vdwg.mxu0
    %901 = vmatpush.bf16.msra.mxu0 %v760
    %902 = vmatpush.bf16.msra.mxu0 %v759
    %903 = vmatpush.bf16.msra.mxu0 %v758
    %904 = vmatpush.bf16.msra.mxu0 %v757
    %905 = vmatpush.bf16.msra.mxu0 %v756
    %906 = vmatpush.bf16.msra.mxu0 %v755
    %907 = vmatpush.bf16.msra.mxu0 %v754
    %908 = vmatpush.bf16.msra.mxu0 %v753
    %909 = vmatmul.bf16.gmra.mxu0 %v329
    %v910 = vpop.f32.mrf.mxu0
    %v911 = vadd.f32 %v898, %v910
    %v912 = vpop.f32.mrf.mxu0
    %913 = vdwg.mxu0
    %914 = vmatpush.bf16.msra.mxu0 %v768
    %915 = vmatpush.bf16.msra.mxu0 %v767
    %916 = vmatpush.bf16.msra.mxu0 %v766
    %917 = vmatpush.bf16.msra.mxu0 %v765
    %918 = vmatpush.bf16.msra.mxu0 %v764
    %919 = vmatpush.bf16.msra.mxu0 %v763
    %920 = vmatpush.bf16.msra.mxu0 %v762
    %921 = vmatpush.bf16.msra.mxu0 %v761
    %922 = vmatmul.bf16.gmra.mxu0 %v330
    %v923 = vpop.f32.mrf.mxu0
    %v924 = vadd.f32 %v911, %v923
    %v925 = vpop.f32.mrf.mxu0
    %926 = vdwg.mxu0
    %927 = vmatpush.bf16.msra.mxu0 %v776
    %928 = vmatpush.bf16.msra.mxu0 %v775
    %929 = vmatpush.bf16.msra.mxu0 %v774
    %930 = vmatpush.bf16.msra.mxu0 %v773
    %931 = vmatpush.bf16.msra.mxu0 %v772
    %932 = vmatpush.bf16.msra.mxu0 %v771
    %933 = vmatpush.bf16.msra.mxu0 %v770
    %934 = vmatpush.bf16.msra.mxu0 %v769
    %935 = vmatmul.bf16.gmra.mxu0 %v331
    %v936 = vpop.f32.mrf.mxu0
    %v937 = vadd.f32 %v924, %v936
    %v938 = vpop.f32.mrf.mxu0
    %939 = vdwg.mxu0
    %940 = vmatpush.bf16.msra.mxu0 %v784
    %941 = vmatpush.bf16.msra.mxu0 %v783
    %942 = vmatpush.bf16.msra.mxu0 %v782
    %943 = vmatpush.bf16.msra.mxu0 %v781
    %944 = vmatpush.bf16.msra.mxu0 %v780
    %945 = vmatpush.bf16.msra.mxu0 %v779
    %946 = vmatpush.bf16.msra.mxu0 %v778
    %947 = vmatpush.bf16.msra.mxu0 %v777
    %948 = vmatmul.bf16.gmra.mxu0 %v332
    %v949 = vpop.f32.mrf.mxu0
    %v950 = vadd.f32 %v937, %v949
    %v951 = vpop.f32.mrf.mxu0
    %952 = vdwg.mxu0
    %v953 = vpack.c.bf16 %v950, %v950
    %v954 = vld [vmem:[#allocation10] sm:$0xf]
    %v955 = vld [vmem:[#allocation10 + $0x4] sm:$0xf]
    %v956 = vld [vmem:[#allocation10 + $0x8] sm:$0xf]
    %v957 = vld [vmem:[#allocation10 + $0xc] sm:$0xf]
    %v958 = vld [vmem:[#allocation10 + $0x10] sm:$0xf]
    %v959 = vld [vmem:[#allocation10 + $0x14] sm:$0xf]
    %v960 = vld [vmem:[#allocation10 + $0x18] sm:$0xf]
    %v961 = vld [vmem:[#allocation10 + $0x1c] sm:$0xf]
    %v962 = vld [vmem:[#allocation10 + $0x20] sm:$0xf]
    %v963 = vld [vmem:[#allocation10 + $0x24] sm:$0xf]
    %v964 = vld [vmem:[#allocation10 + $0x28] sm:$0xf]
    %v965 = vld [vmem:[#allocation10 + $0x2c] sm:$0xf]
    %v966 = vld [vmem:[#allocation10 + $0x30] sm:$0xf]
    %v967 = vld [vmem:[#allocation10 + $0x34] sm:$0xf]
    %v968 = vld [vmem:[#allocation10 + $0x38] sm:$0xf]
    %v969 = vld [vmem:[#allocation10 + $0x3c] sm:$0xf]
    %v970 = vld [vmem:[%s6] sm:$0x1]
    %v972 = vperm.slane %v970, 0
    %v990 = vunpack.c.l.b16 %v954
    %v991 = vunpack.c.l.b16 %v955
    %v992 = vunpack.c.l.b16 %v956
    %v993 = vunpack.c.l.b16 %v957
    %v994 = vunpack.c.l.b16 %v958
    %v995 = vunpack.c.l.b16 %v959
    %v996 = vunpack.c.l.b16 %v960
    %v997 = vunpack.c.l.b16 %v961
    %v998 = vunpack.c.l.b16 %v962
    %v999 = vunpack.c.l.b16 %v963
    %v1000 = vunpack.c.l.b16 %v964
    %v1001 = vunpack.c.l.b16 %v965
    %v1002 = vunpack.c.l.b16 %v966
    %v1003 = vunpack.c.l.b16 %v967
    %v1004 = vunpack.c.l.b16 %v968
    %v1005 = vunpack.c.l.b16 %v969
    %v1006 = vpack.c.b16 %v991, %v990
    %v1007 = vpack.c.b16 %v993, %v992
    %v1008 = vpack.c.b16 %v995, %v994
    %v1009 = vpack.c.b16 %v997, %v996
    %v1010 = vpack.c.b16 %v999, %v998
    %v1011 = vpack.c.b16 %v1001, %v1000
    %v1012 = vpack.c.b16 %v1003, %v1002
    %v1013 = vpack.c.b16 %v1005, %v1004
    %1022 = vmatpush.bf16.msra.mxu0 %v1013
    %1023 = vmatpush.bf16.msra.mxu0 %v1012
    %1024 = vmatpush.bf16.msra.mxu0 %v1011
    %1025 = vmatpush.bf16.msra.mxu0 %v1010
    %1026 = vmatpush.bf16.msra.mxu0 %v1009
    %1027 = vmatpush.bf16.msra.mxu0 %v1008
    %1028 = vmatpush.bf16.msra.mxu0 %v1007
    %1029 = vmatpush.bf16.msra.mxu0 %v1006
    %1030 = vmatmul.bf16.gmra.mxu0 %v953
    %v1031 = vpop.f32.mrf.mxu0
    %v1032 = vadd.f32 %v972, %v1031
    %v1033 = vpop.f32.mrf.mxu0
    %1034 = vdwg.mxu0
    %1035 = vst [vmem:[#allocation11] sm:$0xff] %v1032
    // Predicated region
    $region50: #{tpu_custom_call.1} parent=1 // pred_check
      _
    $region51: #{tpu_custom_call.1} parent=1 // pred_check_branch
      %1037 = sbr.rel (0) target = $region53
    $region52: #{tpu_custom_call.1} parent=1 // pred_region
      %1039 = vsyncadd [#allocation4], 0
      %s1041 = sshll.u32 [#allocation11], 4
      %s1042 = int_to_ptr.vmem [resolvable:$true] %s1041
      %s1043 = sshll.u32 %s7, 4
      %s1044 = int_to_ptr.hbm [resolvable:$true] %s1043
      %1046 = dma.vmem_to_hbm [thread:$0]  %s1042, 128, %s1044, [#allocation4]
    $region53: #{tpu_custom_call.1} parent=1 // pred_fallthru
      _
    // Predicated region
    $region54: #{tpu_custom_call.1} parent=1 // pred_check
      _
    $region55: #{tpu_custom_call.1} parent=1 // pred_check_branch
      %1048 = sbr.rel (0) target = $region57
    $region56: #{tpu_custom_call.1} parent=1 // pred_region
      %1050 = dma.done [#allocation4], 128
    $region57: #{tpu_custom_call.1} parent=1 // pred_fallthru
      _
    %1051 = vsyncpa [#allocation3], 1
    %1052 = vsyncpa [#allocation6], 1
    %1053 = vsyncpa [#allocation9], 1
    %1054 = vsyncpa [#allocation4], 1

</llo_original>
